<compile_context>
chip_gen: v5e
topology: v5e:2x2
jax: 0.10.0
libtpu: 0.0.40
codegen_flags: <defaults>
</compile_context>

<pallas_src>
import functools

import jax
import jax.numpy as jnp
from jax.experimental import pallas as pl
from jax.experimental.pallas import tpu as pltpu


def _pad_left_kernel(x_ref, o_ref, *, pad: int):
    """out = concat(zeros[:, :pad], x) for the current row tile.

    Built as one full-width tile in vregs, then a single lane-dense,
    unmasked store (no offset slice-stores, no masked boundary stores).
    """
    o_ref[...] = jnp.pad(x_ref[...], ((0, 0), (pad, 0)))


def _vmem_budget_and_limit() -> tuple[int, int]:
    """Generation-aware VMEM budget (for tile sizing) and scoped-VMEM limit."""
    try:
        cap = int(pltpu.get_tpu_info().vmem_capacity_bytes)
    except Exception:
        cap = 64 * 1024 * 1024  # conservative: v7x physical VMEM per TC
    # Scoped limit: ~75% of physical, capped at 100 MiB (v5e/v6e: ~96 MiB,
    # v7x: 48 MiB). Budget for the double-buffered tiles stays under that.
    limit = min(int(cap * 0.75), 100 * 1024 * 1024)
    budget = int(limit * 0.90)
    return budget, limit


def _pick_row_tile(rows: int, seq: int, out_seq: int, itemsize: int,
                   budget_bytes: int) -> int:
    """Row-tile size: big enough to amortize per-step overhead, small enough
    to (a) fit double-buffered in+out tiles in the VMEM budget and
    (b) leave >= 2 grid steps so v7x megacore sharding has work for both TCs."""
    # Sublane packing multiple for the dtype (f32 -> 8, bf16 -> 16, int8 -> 32).
    sub = max(8, 32 // max(itemsize, 1))
    if rows <= sub:
        # Full-extent row block: layout-legal regardless of alignment, and a
        # single grid step is all this shape can support anyway.
        return rows
    per_row_bytes = 2 * (seq + out_seq) * itemsize  # double-buffered in + out
    tm = max(sub, budget_bytes // max(per_row_bytes, 1))
    # Roofline curve flattens past ~1-2K rows per tile; cap to avoid waste.
    tm = min(tm, 2048)
    # Grid length >= 2 beats a marginally bigger tile (megacore on v7x).
    tm = min(tm, pl.cdiv(rows, 2))
    # Round down to a sublane multiple (partial last block is handled by Pallas).
    tm = max(sub, (tm // sub) * sub)
    return tm


def pad_left(x: jax.Array, pad: int) -> jax.Array:
    """Pallas implementation of PadLeft(pad)(x) == F.pad(x, (pad, 0))."""
    # TODO(synk): negative pad (F.pad crop semantics) is not supported here.
    assert pad >= 0, "pad_left only supports non-negative pad"
    if pad == 0:
        return x

    orig_shape = x.shape
    seq = orig_shape[-1]
    rows = 1
    for d in orig_shape[:-1]:
        rows *= d

    out_seq = seq + pad
    x2d = x.reshape(rows, seq)

    itemsize = jnp.dtype(x.dtype).itemsize
    budget_bytes, vmem_limit = _vmem_budget_and_limit()
    tm = _pick_row_tile(rows, seq, out_seq, itemsize, budget_bytes)
    grid = (pl.cdiv(rows, tm),)

    kernel = functools.partial(_pad_left_kernel, pad=pad)

    out2d = pl.pallas_call(
        kernel,
        out_shape=jax.ShapeDtypeStruct((rows, out_seq), x.dtype),
        grid_spec=pltpu.PrefetchScalarGridSpec(
            num_scalar_prefetch=0,
            grid=grid,
            # Lane axis full-width (block == full extent); row axis tiled.
            in_specs=[pl.BlockSpec((tm, seq), lambda i: (i, 0))],
            out_specs=pl.BlockSpec((tm, out_seq), lambda i: (i, 0)),
        ),
        compiler_params=pltpu.CompilerParams(
            # Rows are fully independent -> megacore sharding on v7x.
            dimension_semantics=("parallel",),
            vmem_limit_bytes=vmem_limit,
        ),
        # Pure memory traffic: 0 FLOPs, read rows*seq + write rows*out_seq.
        cost_estimate=pl.CostEstimate(
            flops=0,
            transcendentals=0,
            bytes_accessed=rows * itemsize * (seq + out_seq),
        ),
    )(x2d)

    return out2d.reshape(*orig_shape[:-1], out_seq)


if __name__ == "__main__":
    key = jax.random.PRNGKey(0)
    # Small shape consistent with how PadLeft is used in tranception
    # (pad along the sequence axis before a causal depthwise conv):
    # x: (batch, channels, seq)
    B, C, L = 2, 4, 16
    pad = 3

    x = jax.random.normal(key, (B, C, L), dtype=jnp.float32)

    out = pad_left(x, pad)
    out = jax.block_until_ready(out)

    # Reference check against plain JAX padding (same semantics as F.pad).
    ref = jnp.pad(x, ((0, 0), (0, 0), (pad, 0)))
    assert out.shape == (B, C, L + pad), out.shape
    assert out.dtype == x.dtype
    assert jnp.allclose(out, ref), "mismatch vs reference"

    # Also exercise a multi-tile / multi-grid-step path (rows > sublane mult).
    B2, C2, L2 = 8, 32, 128
    x2 = jax.random.normal(key, (B2, C2, L2), dtype=jnp.float32)
    out2 = jax.block_until_ready(pad_left(x2, pad))
    ref2 = jnp.pad(x2, ((0, 0), (0, 0), (pad, 0)))
    assert out2.shape == (B2, C2, L2 + pad)
    assert jnp.allclose(out2, ref2), "mismatch vs reference (large case)"

    print("KERNEL_OK")
</pallas_src>

<mosaic_0001>
module attributes {stable_mosaic.version = 11 : i64} {
  func.func @_pad_left_kernel(%arg0: i32, %arg1: memref<8x16xf32, #tpu.memory_space<vmem>>, %arg2: memref<8x19xf32, #tpu.memory_space<vmem>>) attributes {dimension_semantics = [#tpu.dimension_semantics<parallel>], iteration_bounds = array<i64: 1>, scalar_prefetch = 0 : i64, scratch_operands = 0 : i64, tpu.core_type = #tpu.core_type<tc>, window_params = [{transform_indices = @transform_0, window_bounds = array<i64: 8, 16>}, {transform_indices = @transform_1, window_bounds = array<i64: 8, 19>}]} {
    %c0 = arith.constant 0 : index
    %c0_0 = arith.constant 0 : index
    %0 = vector.load %arg1[%c0, %c0_0] : memref<8x16xf32, #tpu.memory_space<vmem>>, vector<8x16xf32>
    %c0_i32 = arith.constant 0 : i32
    %1 = arith.sitofp %c0_i32 : i32 to f32
    %2 = vector.broadcast %1 : f32 to vector<8x3xf32>
    %3 = tpu.concatenate %2, %0 in 1 : vector<8x3xf32>, vector<8x16xf32> -> vector<8x19xf32>
    %c0_1 = arith.constant 0 : index
    %c0_2 = arith.constant 0 : index
    %4 = vector.load %arg2[%c0_1, %c0_2] : memref<8x19xf32, #tpu.memory_space<vmem>>, vector<8x19xf32>
    tpu.vector_store %arg2[%c0_1, %c0_2], %3 {strides = array<i32>} : memref<8x19xf32, #tpu.memory_space<vmem>>, vector<8x19xf32>,
    return
  }
  func.func @transform_0(%arg0: i32) -> (i32, i32) {
    %c0_i32 = arith.constant 0 : i32
    %c0_i32_0 = arith.constant 0 : i32
    return %arg0, %c0_i32 : i32, i32
  }
  func.func @transform_1(%arg0: i32) -> (i32, i32) {
    %c0_i32 = arith.constant 0 : i32
    %c0_i32_0 = arith.constant 0 : i32
    return %arg0, %c0_i32 : i32, i32
  }
}

</mosaic_0001>

<llo_original>
// kernel: tpu_custom_call.1
$region0: #{tpu_custom_call.1}
  #allocation0 [shape = 'u32[]', space=smem, size = 0x4, offset = 0x4, fixed_abs, tag = 'smem constant byte address 0x4 - core index']
  #allocation1 [shape = 'u32[72,128]{1,0:T(1,128)}', space=vmem, size = 0x9000, scoped, tag = 'internal scratch']
  %s0 = inlined_call_operand.hbm [shape: f32[8,16], index: 0, kind: input, shape index: {}]
  %s1 = inlined_call_operand.hbm [shape: f32[8,19], index: 1, kind: output, shape index: {}]
  %s2 = sld [smem:[#allocation0]]
  $region18: #{tpu_custom_call.1} parent=0
    _
  %s4 = ssub.s32 1, %s2
  %s5 = scalar_select 0, %s4, %s2
  $region1: #{tpu_custom_call.1} parent=0
    #allocation2 [shape = 'u8[4096]{0}', space=vmem, size = 0x1000, scoped, tag = 'input window, operand 0, single buffered']
    #allocation3 [shape = 's32[1]{0}', space=sflag, size = 0x4, scoped, tag = 'scoped memory for tpu_custom_call.1']
    #allocation4 [shape = 's32[1]{0}', space=sflag, size = 0x4, scoped, tag = 'scoped memory for tpu_custom_call.1']
    #allocation5 [shape = 'u8[4096]{0}', space=vmem, size = 0x1000, scoped, tag = 'output window, operand 0, single buffered']
    %6 = vsyncpa [#allocation3], 0
    %7 = vsyncpa [#allocation4], 0
    // Predicated region
    $region2: #{tpu_custom_call.1} parent=1 // pred_check
      _
    $region3: #{tpu_custom_call.1} parent=1 // pred_check_branch
      %9 = sbr.rel (0) target = $region5
    $region4: #{tpu_custom_call.1} parent=1 // pred_region
      %11 = vsyncadd [#allocation3], 0
      %s13 = sshll.u32 %s0, 4
      %s14 = int_to_ptr.hbm [resolvable:$true] %s13
      %s15 = sshll.u32 [#allocation2], 4
      %s16 = int_to_ptr.vmem [resolvable:$true] %s15
      %18 = dma.hbm_to_vmem [thread:$0]  %s14, 128, %s16, [#allocation3]
    $region5: #{tpu_custom_call.1} parent=1 // pred_fallthru
      _
    // Predicated region
    $region6: #{tpu_custom_call.1} parent=1 // pred_check
      _
    $region7: #{tpu_custom_call.1} parent=1 // pred_check_branch
      %20 = sbr.rel (0) target = $region9
    $region8: #{tpu_custom_call.1} parent=1 // pred_region
      %22 = dma.done [#allocation3], 128
    $region9: #{tpu_custom_call.1} parent=1 // pred_fallthru
      _
    %v23 = vld [vmem:[#allocation2] sm:$0xff]
    %25 = vrot.lane.b32.xlu0 %v23, 3
    %v26 = vpop.permute.xlu0 %25
    %vm28 = vcmask 23552
    %v29 = vsel %vm28, 0.0, %v26
    %vm30 = vcmask 154624
    %31 = vst.msk [vmem:[#allocation5] sm:$0xff] %vm30, %v29
    // Predicated region
    $region10: #{tpu_custom_call.1} parent=1 // pred_check
      _
    $region11: #{tpu_custom_call.1} parent=1 // pred_check_branch
      %33 = sbr.rel (0) target = $region13
    $region12: #{tpu_custom_call.1} parent=1 // pred_region
      %35 = vsyncadd [#allocation4], 0
      %s37 = sshll.u32 [#allocation5], 4
      %s38 = int_to_ptr.vmem [resolvable:$true] %s37
      %s39 = sshll.u32 %s1, 4
      %s40 = int_to_ptr.hbm [resolvable:$true] %s39
      %42 = dma.vmem_to_hbm [thread:$0]  %s38, 128, %s40, [#allocation4]
    $region13: #{tpu_custom_call.1} parent=1 // pred_fallthru
      _
    // Predicated region
    $region14: #{tpu_custom_call.1} parent=1 // pred_check
      _
    $region15: #{tpu_custom_call.1} parent=1 // pred_check_branch
      %44 = sbr.rel (0) target = $region17
    $region16: #{tpu_custom_call.1} parent=1 // pred_region
      %46 = dma.done [#allocation4], 128
    $region17: #{tpu_custom_call.1} parent=1 // pred_fallthru
      _
    %47 = vsyncpa [#allocation3], 1
    %48 = vsyncpa [#allocation4], 1

</llo_original>
